<compile_context>
chip_gen: v7x
topology: tpu7x:2x2x1
jax: 0.10.0
libtpu: 0.0.40
codegen_flags: <defaults>
</compile_context>

<pallas_src>
import functools

import jax
import jax.numpy as jnp
from jax import lax
from jax.experimental import pallas as pl
from jax.experimental.pallas import tpu as pltpu


_SLAB_BUDGET = 4 * 1024 * 1024          # one (TC, L) x-slab; ~4x live with double buffering
_APPLY_VMEM_LIMIT = 32 * 1024 * 1024    # explicit scoped-VMEM limit (safe on v5e/v6e/v7x)


def _divisors(n):
    return [d for d in range(1, n + 1) if n % d == 0]


def _sublane_multiple(itemsize):
    # native layout tile is (8, 128) x 32-bit; packed dtypes pack along sublanes
    return 8 * max(1, 4 // itemsize)


def _pick_batch_tile(N, Hp, Wp, budget=512 * 1024):
    """Largest divisor of N whose (Nb, Hp, Wp) f32 noise block fits `budget`."""
    per_plane = Hp * Wp * 4
    nb = max(1, min(N, budget // max(per_plane, 1)))
    while N % nb != 0:
        nb -= 1
    return nb


def _pick_channel_fold(C, HW, itemsize, max_lane_bytes):
    """Fold G consecutive channels into the lane dim (lane extent L = G*HW).

    Prefer the smallest modest G dividing C with L % 128 == 0 (unmasked,
    full-width vst); otherwise the largest G keeping L <= 2048 (mostly
    lane-dense stores for tiny feature maps at small mask-replication cost)."""
    for g in _divisors(C):
        if g > 64:
            break
        if (g * HW) % 128 == 0 and g * HW * itemsize <= max_lane_bytes:
            return g
    best = 1
    for g in _divisors(C):
        if g * HW <= 2048 and g * HW * itemsize <= max_lane_bytes:
            best = g
    return best


def _pick_channel_tile(CG, L, itemsize, slab_budget):
    """Largest channel tile (divisor of CG; sublane-aligned when < CG) whose
    (TC, L) slab fits slab_budget.  The full extent is always layout-legal."""
    if CG * L * itemsize <= slab_budget:
        return CG
    sub = _sublane_multiple(itemsize)
    fitting = [d for d in _divisors(CG)
               if d % sub == 0 and d * L * itemsize <= slab_budget]
    if fitting:
        return max(fitting)
    aligned = [d for d in _divisors(CG) if d % sub == 0 and d < CG]
    return min(aligned) if aligned else CG


# ---------------------------------------------------------------------------
# Kernel 1: seed mask -> separable stride-1 max pool -> block mask (+ sums)
# ---------------------------------------------------------------------------
def _block_mask_kernel(u_ref, bm_ref, sum_ref, *, gamma, block_size, H, W):
    """u_ref:  (Nb, H+bs-1, W+bs-1) uniform noise, halo padded with 1.0
               (the halo never seeds a drop block -> zero-padded max pool).
    bm_ref:  (Nb, H, W) block mask (1.0 keep / 0.0 drop).
    sum_ref: (Nb, 1, 1) per-plane sum of the block mask (for renormalisation)."""
    seed = (u_ref[...] < gamma).astype(jnp.float32)          # (Nb, Hp, Wp)
    # separable max pool: lane (W) shifts first, then sublane (H) shifts
    rmax = seed[:, :, 0:W]
    for dx in range(1, block_size):
        rmax = jnp.maximum(rmax, seed[:, :, dx:dx + W])      # (Nb, Hp, W)
    pooled = rmax[:, 0:H, :]
    for dy in range(1, block_size):
        pooled = jnp.maximum(pooled, rmax[:, dy:dy + H, :])  # (Nb, H, W)
    bm = 1.0 - pooled
    bm_ref[...] = bm
    row = jnp.sum(bm, axis=2, keepdims=True)                 # (Nb, H, 1)
    sum_ref[...] = jnp.sum(row, axis=1, keepdims=True)       # (Nb, 1, 1)


# ---------------------------------------------------------------------------
# Kernel 2: out = x * (scale-folded mask), mask broadcast across channel tile
# ---------------------------------------------------------------------------
def _apply_kernel(x_ref, bm_ref, o_ref):
    # x_ref: (1, TC, L), bm_ref: (1, 1, L) already in x.dtype with scale folded
    o_ref[...] = (x_ref[...] * bm_ref[...]).astype(o_ref.dtype)


# ---------------------------------------------------------------------------
# DropBlock2D forward
# ---------------------------------------------------------------------------
def dropblock2d_forward(x, key, *, drop_prob, block_size, training=True):
    if (not training) or drop_prob == 0.0:
        return x                                             # PyTorch identity path

    N, C, H, W = x.shape
    bs = int(block_size)
    gamma = float(drop_prob) / float(bs * bs)
    pad_lo = bs // 2
    pad_hi = bs - 1 - pad_lo                  # even block_size crop via asymmetric pad
    Hp, Wp = H + bs - 1, W + bs - 1

    # torch.rand equivalent; halo padded with 1.0 so it can never seed a block
    u = jax.random.uniform(key, (N, H, W), jnp.float32)
    u_pad = jnp.pad(u, ((0, 0), (pad_lo, pad_hi), (pad_lo, pad_hi)),
                    constant_values=1.0)

    nb = _pick_batch_tile(N, Hp, Wp)
    block_mask, plane_sums = pl.pallas_call(
        functools.partial(_block_mask_kernel, gamma=gamma, block_size=bs,
                          H=H, W=W),
        out_shape=(jax.ShapeDtypeStruct((N, H, W), jnp.float32),
                   jax.ShapeDtypeStruct((N, 1, 1), jnp.float32)),
        grid_spec=pltpu.PrefetchScalarGridSpec(
            num_scalar_prefetch=0,
            grid=(N // nb,),
            in_specs=[pl.BlockSpec((nb, Hp, Wp), lambda n: (n, 0, 0))],
            out_specs=[pl.BlockSpec((nb, H, W), lambda n: (n, 0, 0)),
                       pl.BlockSpec((nb, 1, 1), lambda n: (n, 0, 0))],
        ),
        compiler_params=pltpu.CompilerParams(
            dimension_semantics=("parallel",)),
    )(u_pad)

    # global renormalisation numel / sum from the tiny per-plane sums
    total = jnp.sum(plane_sums, dtype=jnp.float32)
    scale = jnp.float32(N * H * W) / jnp.maximum(total, jnp.float32(1.0))

    # fold scale into the mask, cast to x.dtype, fold G channels into lanes
    itemsize = jnp.dtype(x.dtype).itemsize
    HW = H * W
    G = _pick_channel_fold(C, HW, itemsize, _SLAB_BUDGET // 8)
    CG, L = C // G, G * HW
    TC = _pick_channel_tile(CG, L, itemsize, _SLAB_BUDGET)

    bm_scaled = (block_mask.reshape(N, 1, HW) * scale).astype(x.dtype)
    bm_lane = jnp.tile(bm_scaled, (1, 1, G)) if G > 1 else bm_scaled  # (N, 1, L)
    x3 = x.reshape(N, CG, L)

    out = pl.pallas_call(
        _apply_kernel,
        out_shape=jax.ShapeDtypeStruct((N, CG, L), x.dtype),
        grid_spec=pltpu.PrefetchScalarGridSpec(
            num_scalar_prefetch=0,
            grid=(N, CG // TC),
            in_specs=[pl.BlockSpec((1, TC, L), lambda n, c: (n, c, 0)),
                      pl.BlockSpec((1, 1, L), lambda n, c: (n, 0, 0))],
            out_specs=pl.BlockSpec((1, TC, L), lambda n, c: (n, c, 0)),
        ),
        compiler_params=pltpu.CompilerParams(
            dimension_semantics=("parallel", "parallel"),
            vmem_limit_bytes=_APPLY_VMEM_LIMIT),
    )(x3, bm_lane)
    return out.reshape(N, C, H, W)


# ---------------------------------------------------------------------------
# Pure-JAX reference (same RNG draw) for correctness checking
# ---------------------------------------------------------------------------
def dropblock2d_reference(x, key, *, drop_prob, block_size, training=True):
    if (not training) or drop_prob == 0.0:
        return x
    N, C, H, W = x.shape
    bs = int(block_size)
    gamma = float(drop_prob) / float(bs * bs)
    pad_lo = bs // 2
    pad_hi = bs - 1 - pad_lo
    u = jax.random.uniform(key, (N, H, W), jnp.float32)
    seed = (u < gamma).astype(jnp.float32)
    pooled = lax.reduce_window(
        seed, 0.0, lax.max,
        window_dimensions=(1, bs, bs), window_strides=(1, 1, 1),
        padding=((0, 0), (pad_lo, pad_hi), (pad_lo, pad_hi)))
    block_mask = 1.0 - pooled
    scale = jnp.float32(block_mask.size) / jnp.maximum(jnp.sum(block_mask), 1.0)
    return x * block_mask[:, None, :, :] * scale


if __name__ == "__main__":
    N, C, H, W = 2, 4, 16, 16
    drop_prob, block_size = 0.1, 3

    key = jax.random.PRNGKey(0)
    kx, kmask = jax.random.split(key)
    x = jax.random.normal(kx, (N, C, H, W), jnp.float32)     # NCHW, like torch

    fwd = jax.jit(functools.partial(dropblock2d_forward,
                                    drop_prob=drop_prob,
                                    block_size=block_size,
                                    training=True))
    y = fwd(x, kmask)
    jax.block_until_ready(y)

    y_ref = dropblock2d_reference(x, kmask, drop_prob=drop_prob,
                                  block_size=block_size, training=True)
    assert y.shape == (N, C, H, W) and y.dtype == x.dtype
    assert jnp.allclose(y, y_ref, rtol=1e-5, atol=1e-5), \
        float(jnp.max(jnp.abs(y - y_ref)))

    # eval path is the identity (no kernel launch), as in the PyTorch module
    y_eval = dropblock2d_forward(x, kmask, drop_prob=drop_prob,
                                 block_size=block_size, training=False)
    assert jnp.array_equal(y_eval, x)

    print("KERNEL_OK")
</pallas_src>

<mosaic_0001>
module attributes {stable_mosaic.version = 11 : i64} {
  func.func @_block_mask_kernel(%arg0: i32, %arg1: memref<2x18x18xf32, #tpu.memory_space<vmem>>, %arg2: memref<2x16x16xf32, #tpu.memory_space<vmem>>, %arg3: memref<2x1x1xf32, #tpu.memory_space<vmem>>) attributes {dimension_semantics = [#tpu.dimension_semantics<parallel>], iteration_bounds = array<i64: 1>, scalar_prefetch = 0 : i64, scratch_operands = 0 : i64, tpu.core_type = #tpu.core_type<tc>, window_params = [{transform_indices = @transform_0, window_bounds = array<i64: 2, 18, 18>}, {transform_indices = @transform_1, window_bounds = array<i64: 2, 16, 16>}, {transform_indices = @transform_2, window_bounds = array<i64: 2, 1, 1>}]} {
    %c0 = arith.constant 0 : index
    %c0_0 = arith.constant 0 : index
    %c0_1 = arith.constant 0 : index
    %0 = vector.load %arg1[%c0, %c0_0, %c0_1] : memref<2x18x18xf32, #tpu.memory_space<vmem>>, vector<2x18x18xf32>
    %cst = arith.constant 0.0111111114 : f32
    %1 = vector.broadcast %cst : f32 to vector<2x18x18xf32>
    %2 = arith.cmpf olt, %0, %1 : vector<2x18x18xf32>
    %3 = arith.extui %2 : vector<2x18x18xi1> to vector<2x18x18xi32>
    %4 = arith.sitofp %3 : vector<2x18x18xi32> to vector<2x18x18xf32>
    %5 = vector.extract_strided_slice %4 {offsets = [0, 0, 0], sizes = [2, 18, 16], strides = [1, 1, 1]} : vector<2x18x18xf32> to vector<2x18x16xf32>
    %6 = vector.extract_strided_slice %4 {offsets = [0, 0, 1], sizes = [2, 18, 16], strides = [1, 1, 1]} : vector<2x18x18xf32> to vector<2x18x16xf32>
    %7 = arith.maximumf %5, %6 : vector<2x18x16xf32>
    %8 = vector.extract_strided_slice %4 {offsets = [0, 0, 2], sizes = [2, 18, 16], strides = [1, 1, 1]} : vector<2x18x18xf32> to vector<2x18x16xf32>
    %9 = arith.maximumf %7, %8 : vector<2x18x16xf32>
    %10 = vector.extract_strided_slice %9 {offsets = [0, 0, 0], sizes = [2, 16, 16], strides = [1, 1, 1]} : vector<2x18x16xf32> to vector<2x16x16xf32>
    %11 = vector.extract_strided_slice %9 {offsets = [0, 1, 0], sizes = [2, 16, 16], strides = [1, 1, 1]} : vector<2x18x16xf32> to vector<2x16x16xf32>
    %12 = arith.maximumf %10, %11 : vector<2x16x16xf32>
    %13 = vector.extract_strided_slice %9 {offsets = [0, 2, 0], sizes = [2, 16, 16], strides = [1, 1, 1]} : vector<2x18x16xf32> to vector<2x16x16xf32>
    %14 = arith.maximumf %12, %13 : vector<2x16x16xf32>
    %cst_2 = arith.constant 1.000000e+00 : f32
    %15 = vector.broadcast %cst_2 : f32 to vector<2x16x16xf32>
    %16 = arith.subf %15, %14 : vector<2x16x16xf32>
    %c0_3 = arith.constant 0 : index
    %c0_4 = arith.constant 0 : index
    %c0_5 = arith.constant 0 : index
    %17 = vector.load %arg2[%c0_3, %c0_4, %c0_5] : memref<2x16x16xf32, #tpu.memory_space<vmem>>, vector<2x16x16xf32>
    tpu.vector_store %arg2[%c0_3, %c0_4, %c0_5], %16 {strides = array<i32>} : memref<2x16x16xf32, #tpu.memory_space<vmem>>, vector<2x16x16xf32>,
    %cst_6 = arith.constant dense<0.000000e+00> : vector<2x16xf32>
    %18 = vector.multi_reduction <add>, %16, %cst_6 [2] : vector<2x16x16xf32> to vector<2x16xf32>
    %19 = vector.shape_cast %18 : vector<2x16xf32> to vector<2x16x1xf32>
    %cst_7 = arith.constant dense<0.000000e+00> : vector<2x1xf32>
    %20 = vector.multi_reduction <add>, %19, %cst_7 [1] : vector<2x16x1xf32> to vector<2x1xf32>
    %21 = vector.shape_cast %20 : vector<2x1xf32> to vector<2x1x1xf32>
    %c0_8 = arith.constant 0 : index
    %c0_9 = arith.constant 0 : index
    %c0_10 = arith.constant 0 : index
    %22 = vector.load %arg3[%c0_8, %c0_9, %c0_10] : memref<2x1x1xf32, #tpu.memory_space<vmem>>, vector<2x1x1xf32>
    tpu.vector_store %arg3[%c0_8, %c0_9, %c0_10], %21 {strides = array<i32>} : memref<2x1x1xf32, #tpu.memory_space<vmem>>, vector<2x1x1xf32>,
    return
  }
  func.func @transform_0(%arg0: i32) -> (i32, i32, i32) {
    %c0_i32 = arith.constant 0 : i32
    %c0_i32_0 = arith.constant 0 : i32
    %c0_i32_1 = arith.constant 0 : i32
    return %arg0, %c0_i32, %c0_i32_0 : i32, i32, i32
  }
  func.func @transform_1(%arg0: i32) -> (i32, i32, i32) {
    %c0_i32 = arith.constant 0 : i32
    %c0_i32_0 = arith.constant 0 : i32
    %c0_i32_1 = arith.constant 0 : i32
    return %arg0, %c0_i32, %c0_i32_0 : i32, i32, i32
  }
  func.func @transform_2(%arg0: i32) -> (i32, i32, i32) {
    %c0_i32 = arith.constant 0 : i32
    %c0_i32_0 = arith.constant 0 : i32
    %c0_i32_1 = arith.constant 0 : i32
    return %arg0, %c0_i32, %c0_i32_0 : i32, i32, i32
  }
}

module attributes {stable_mosaic.version = 11 : i64} {
  func.func @_apply_kernel(%arg0: i32, %arg1: i32, %arg2: memref<1x4x256xf32, #tpu.memory_space<vmem>>, %arg3: memref<1x1x256xf32, #tpu.memory_space<vmem>>, %arg4: memref<1x4x256xf32, #tpu.memory_space<vmem>>) attributes {dimension_semantics = [#tpu.dimension_semantics<parallel>, #tpu.dimension_semantics<parallel>], iteration_bounds = array<i64: 2, 1>, scalar_prefetch = 0 : i64, scratch_operands = 0 : i64, tpu.core_type = #tpu.core_type<tc>, window_params = [{transform_indices = @transform_0, window_bounds = array<i64: 1, 4, 256>}, {transform_indices = @transform_1, window_bounds = array<i64: 1, 1, 256>}, {transform_indices = @transform_2, window_bounds = array<i64: 1, 4, 256>}]} {
    %c0 = arith.constant 0 : index
    %c0_0 = arith.constant 0 : index
    %c0_1 = arith.constant 0 : index
    %0 = vector.load %arg2[%c0, %c0_0, %c0_1] : memref<1x4x256xf32, #tpu.memory_space<vmem>>, vector<1x4x256xf32>
    %c0_2 = arith.constant 0 : index
    %c0_3 = arith.constant 0 : index
    %c0_4 = arith.constant 0 : index
    %1 = vector.load %arg3[%c0_2, %c0_3, %c0_4] : memref<1x1x256xf32, #tpu.memory_space<vmem>>, vector<1x1x256xf32>
    %2 = vector.broadcast %1 : vector<1x1x256xf32> to vector<1x4x256xf32>
    %3 = arith.mulf %0, %2 : vector<1x4x256xf32>
    %c0_5 = arith.constant 0 : index
    %c0_6 = arith.constant 0 : index
    %c0_7 = arith.constant 0 : index
    %4 = vector.load %arg4[%c0_5, %c0_6, %c0_7] : memref<1x4x256xf32, #tpu.memory_space<vmem>>, vector<1x4x256xf32>
    tpu.vector_store %arg4[%c0_5, %c0_6, %c0_7], %3 {strides = array<i32>} : memref<1x4x256xf32, #tpu.memory_space<vmem>>, vector<1x4x256xf32>,
    return
  }
  func.func @transform_0(%arg0: i32, %arg1: i32) -> (i32, i32, i32) {
    %c0_i32 = arith.constant 0 : i32
    %c0_i32_0 = arith.constant 0 : i32
    return %arg0, %arg1, %c0_i32 : i32, i32, i32
  }
  func.func @transform_1(%arg0: i32, %arg1: i32) -> (i32, i32, i32) {
    %c0_i32 = arith.constant 0 : i32
    %c0_i32_0 = arith.constant 0 : i32
    %c0_i32_1 = arith.constant 0 : i32
    return %arg0, %c0_i32, %c0_i32_0 : i32, i32, i32
  }
  func.func @transform_2(%arg0: i32, %arg1: i32) -> (i32, i32, i32) {
    %c0_i32 = arith.constant 0 : i32
    %c0_i32_0 = arith.constant 0 : i32
    return %arg0, %arg1, %c0_i32 : i32, i32, i32
  }
}

</mosaic_0001>

<llo_original>
// kernel: dropblock2d_forward.3
$region0: #{dropblock2d_forward.3}
  #allocation0 [shape = 'u32[]', space=smem, size = 0x4, offset = 0x4, fixed_abs, tag = 'smem constant byte address 0x4 - core index']
  #allocation1 [shape = 'u32[144,128]{1,0:T(1,128)}', space=vmem, size = 0x12000, scoped, tag = 'internal scratch']
  %s0 = inlined_call_operand.vmem [shape: f32[2,4,256], index: 0, kind: input, shape index: {}]
  %s1 = inlined_call_operand.vmem [shape: f32[2,1,256], index: 1, kind: input, shape index: {}]
  %s2 = inlined_call_operand.vmem [shape: f32[2,4,256], index: 2, kind: output, shape index: {}]
  %s3 = sld [smem:[#allocation0]]
  $region41: #{dropblock2d_forward.3} parent=0
    _
  %s5 = ssub.s32 1, %s3
  %s6 = scalar_select 0, %s5, %s3
  loop: start=0, step=1, limit=4
  $region2: #{dropblock2d_forward.3} parent=0 // loop_pre_header
    _
  $region3: #{dropblock2d_forward.3} parent=0 // loop_header
    %s8 = sphi 0, %s12
    %p9 = scmp.ge.s32.totalorder %s8, 4
    %s15 = sphi 0, %s27
    %s16 = sphi 0, %s23
    %s17 = sphi 0, %s15
    %s18 = sphi 0, %s16
    %s19 = sphi 0, %s17
    %s20 = sphi 0, %s18
    %s32 = sphi 0, %s34
    %s35 = sphi 0, %s32
    %s36 = sphi 0, %s35
    %s52 = sphi 0, %s36
    %s58 = sphi 0, %s60
    %s61 = sphi 0, %s58
    %s62 = sphi 0, %s61
    %s78 = sphi 0, %s62
    %s86 = sphi 0, %s88
    %s89 = sphi 0, %s86
    %s90 = sphi 0, %s89
    %s106 = sphi 0, %s90
  $region4: #{dropblock2d_forward.3} parent=0 // loop_header_branch
    %11 = sbr.rel (%p9) target = $region8
  $region5: #{dropblock2d_forward.3} parent=0 // loop_body
    %s13 = ssub.s32 %s8, 1
    %s14 = ssub.s32 %s8, 2
    %s21 = sadd.s32 1, %s16
    %p22 = scmp.ge.s32.totalorder %s21, 1
    %s23 = scalar_select %p22, 0, %s21
    %s24 = sadd.s32 1, %s15
    %s25 = scalar_select %p22, %s24, %s15
    %p26 = scmp.ge.s32.totalorder %s25, 2
    %s27 = scalar_select %p26, 0, %s25
    %s28 = ssub.s32 %s15, %s27
    %s29 = ssub.s32 %s16, %s23
    %s30 = sor.u32 %s28, %s29
    %p31 = scmp.eq.s32.totalorder %s30, 0
    %s33 = sadd.s32 %s32, 1
    %s34 = scalar_select %p31, %s32, %s33
    %p37 = pneg %p31
    %p38 = scmp.eq.s32.totalorder %s8, 1
    %p39 = por %p37, %p38
    %p40 = scmp.ne.s32.totalorder %s32, %s35
    %p41 = scmp.eq.s32.totalorder %s8, 0
    %p42 = por %p40, %p41
    %p43 = scmp.ne.s32.totalorder %s32, %s35
    %p44 = scmp.eq.s32.totalorder %s13, 1
    %p45 = por %p43, %p44
    %p46 = scmp.ne.s32.totalorder %s35, %s36
    %p47 = scmp.eq.s32.totalorder %s13, 0
    %p48 = por %p46, %p47
    %p49 = scmp.ne.s32.totalorder %s35, %s36
    %p50 = scmp.eq.s32.totalorder %s14, 1
    %p51 = por %p49, %p50
    %p53 = scmp.ne.s32.totalorder %s36, %s52
    %p54 = scmp.eq.s32.totalorder %s14, 0
    %p55 = por %p53, %p54
    %s56 = ssub.s32 %s15, %s27
    %p57 = scmp.eq.s32.totalorder %s56, 0
    %s59 = sadd.s32 %s58, 1
    %s60 = scalar_select %p57, %s58, %s59
    %p63 = pneg %p57
    %p64 = scmp.eq.s32.totalorder %s8, 1
    %p65 = por %p63, %p64
    %p66 = scmp.ne.s32.totalorder %s58, %s61
    %p67 = scmp.eq.s32.totalorder %s8, 0
    %p68 = por %p66, %p67
    %p69 = scmp.ne.s32.totalorder %s58, %s61
    %p70 = scmp.eq.s32.totalorder %s13, 1
    %p71 = por %p69, %p70
    %p72 = scmp.ne.s32.totalorder %s61, %s62
    %p73 = scmp.eq.s32.totalorder %s13, 0
    %p74 = por %p72, %p73
    %p75 = scmp.ne.s32.totalorder %s61, %s62
    %p76 = scmp.eq.s32.totalorder %s14, 1
    %p77 = por %p75, %p76
    %p79 = scmp.ne.s32.totalorder %s62, %s78
    %p80 = scmp.eq.s32.totalorder %s14, 0
    %p81 = por %p79, %p80
    %s82 = ssub.s32 %s15, %s27
    %s83 = ssub.s32 %s16, %s23
    %s84 = sor.u32 %s82, %s83
    %p85 = scmp.eq.s32.totalorder %s84, 0
    %s87 = sadd.s32 %s86, 1
    %s88 = scalar_select %p85, %s86, %s87
    %p91 = pneg %p85
    %p92 = scmp.eq.s32.totalorder %s8, 1
    %p93 = por %p91, %p92
    %p94 = scmp.ne.s32.totalorder %s86, %s89
    %p95 = scmp.eq.s32.totalorder %s8, 0
    %p96 = por %p94, %p95
    %p97 = scmp.ne.s32.totalorder %s86, %s89
    %p98 = scmp.eq.s32.totalorder %s13, 1
    %p99 = por %p97, %p98
    %p100 = scmp.ne.s32.totalorder %s89, %s90
    %p101 = scmp.eq.s32.totalorder %s13, 0
    %p102 = por %p100, %p101
    %p103 = scmp.ne.s32.totalorder %s89, %s90
    %p104 = scmp.eq.s32.totalorder %s14, 1
    %p105 = por %p103, %p104
    %p107 = scmp.ne.s32.totalorder %s90, %s106
    %p108 = scmp.eq.s32.totalorder %s14, 0
    %p109 = por %p107, %p108
    %p110 = scmp.le.s32.totalorder 1, %s8
    %p111 = scmp.lt.s32.totalorder %s8, 3
    %p112 = pnand %p110, %p111
    %p113 = pneg %p112
    // Predicated region
    $region9: #{dropblock2d_forward.3} parent=5 // pred_check
      _
    $region10: #{dropblock2d_forward.3} parent=5 // pred_check_branch
      %115 = sbr.rel (%p112) target = $region12
    $region11: #{dropblock2d_forward.3} parent=5 // pred_region
      %s116 = ssub.s32 %s8, 1
    $region12: #{dropblock2d_forward.3} parent=5 // pred_fallthru
      _
    %p117 = scmp.lt.s32.totalorder %s8, 2
    // Predicated region
    $region13: #{dropblock2d_forward.3} parent=5 // pred_check
      %p118 = pneg %p117
    $region14: #{dropblock2d_forward.3} parent=5 // pred_check_branch
      %120 = sbr.rel (%p118) target = $region16
    $region15: #{dropblock2d_forward.3} parent=5 // pred_region
      // Predicated region
      $region17: #{dropblock2d_forward.3} parent=15 // pred_check
        %p121 = pneg %p42
      $region18: #{dropblock2d_forward.3} parent=15 // pred_check_branch
        %123 = sbr.rel (%p121) target = $region20
      $region19: #{dropblock2d_forward.3} parent=15 // pred_region
        %p124 = scmp.lt.s32.totalorder %s15, 1
        %s125 = scalar_select %p124, %s15, 1
        %p126 = scmp.lt.s32.totalorder %s16, 0
        %s127 = scalar_select %p126, %s16, 0
        %s128 = smul.addr %s127, 2
        %s129 = smul.addr %s125, 2
        %s130 = sadd.s32 %s128, %s129
        %s131 = smul.addr %s130, 4
        %s132 = scalar_lea.vmem %s0, %s131
      $region20: #{dropblock2d_forward.3} parent=15 // pred_fallthru
        _
      // Predicated region
      $region21: #{dropblock2d_forward.3} parent=15 // pred_check
        %p133 = pneg %p68
      $region22: #{dropblock2d_forward.3} parent=15 // pred_check_branch
        %135 = sbr.rel (%p133) target = $region24
      $region23: #{dropblock2d_forward.3} parent=15 // pred_region
        %p136 = scmp.lt.s32.totalorder %s15, 1
        %s137 = scalar_select %p136, %s15, 1
        %s138 = smul.addr %s137, 2
        %s139 = scalar_lea.vmem %s1, %s138
      $region24: #{dropblock2d_forward.3} parent=15 // pred_fallthru
        _
    $region16: #{dropblock2d_forward.3} parent=5 // pred_fallthru
      _
    %p140 = scmp.le.s32.totalorder 1, %s8
    %p141 = scmp.lt.s32.totalorder %s8, 3
    %p142 = pnand %p140, %p141
    %p143 = pneg %p142
    // Predicated region
    $region25: #{dropblock2d_forward.3} parent=5 // pred_check
      _
    $region26: #{dropblock2d_forward.3} parent=5 // pred_check_branch
      %145 = sbr.rel (%p142) target = $region28
    $region27: #{dropblock2d_forward.3} parent=5 // pred_region
      %s146 = ssub.s32 %s8, 1
      %p147 = scmp.lt.s32.totalorder %s17, 1
      %s148 = scalar_select %p147, %s17, 1
      %p149 = scmp.lt.s32.totalorder %s18, 0
      %s150 = scalar_select %p149, %s18, 0
      %s151 = smul.addr %s150, 2
      %s152 = smul.addr %s148, 2
      %s153 = sadd.s32 %s151, %s152
      %s154 = smul.addr %s153, 4
      %s155 = scalar_lea.vmem %s0, %s154
      %p156 = pneg %p48
      %p157 = pneg %p45
      %p158 = scmp.lt.s32.totalorder %s17, 1
      %s159 = scalar_select %p158, %s17, 1
      %s160 = smul.addr %s159, 2
      %s161 = scalar_lea.vmem %s1, %s160
      %p162 = pneg %p74
      %p163 = pneg %p71
      %p164 = pneg %p102
      %p165 = pneg %p99
      %p166 = scmp.lt.s32.totalorder %s17, 1
      %s167 = scalar_select %p166, %s17, 1
      %p168 = scmp.lt.s32.totalorder %s18, 0
      %s169 = scalar_select %p168, %s18, 0
      %s170 = smul.addr %s169, 2
      %s171 = smul.addr %s167, 2
      %s172 = sadd.s32 %s170, %s171
      %s173 = smul.addr %s172, 4
      %s174 = scalar_lea.vmem %s2, %s173
      %p175 = scmp.lt.s32.totalorder %s17, 1
      %s176 = scalar_select %p175, %s17, 1
      %p177 = scmp.lt.s32.totalorder %s18, 0
      %s178 = scalar_select %p177, %s18, 0
      %s179 = smul.addr %s178, 2
      %s180 = smul.addr %s176, 2
      %s181 = sadd.s32 %s179, %s180
      %s182 = smul.addr %s181, 4
      %s183 = scalar_lea.vmem %s0, %s182
      %p184 = scmp.lt.s32.totalorder %s17, 1
      %s185 = scalar_select %p184, %s17, 1
      %s186 = smul.addr %s185, 2
      %s187 = scalar_lea.vmem %s1, %s186
      %p188 = scmp.lt.s32.totalorder %s17, 1
      %s189 = scalar_select %p188, %s17, 1
      %p190 = scmp.lt.s32.totalorder %s18, 0
      %s191 = scalar_select %p190, %s18, 0
      %s192 = smul.addr %s191, 2
      %s193 = smul.addr %s189, 2
      %s194 = sadd.s32 %s192, %s193
      %s195 = smul.addr %s194, 4
      %s196 = scalar_lea.vmem %s2, %s195
      %v197 = vld [vmem:[%s183] sm:$0xff]
      %v198 = vld [vmem:[%s187] sm:$0x3]
      %v200 = vlaneseq
      %v201 = vshrl.u32 %v200, 7
      %v202 = vsub.s32 0, %v201
      %v203 = vrot.slane %v198, %v202
      %v204 = vlaneseq
      %v205 = vshrl.u32 %v204, 7
      %v206 = vsub.s32 1, %v205
      %v207 = vrot.slane %v198, %v206
      %v208 = vcombine.low %v203, %v207
      %v210 = vmul.f32 %v197, %v208
      %211 = vst [vmem:[%s196] sm:$0xff] %v210
      %p212 = scmp.lt.s32.totalorder %s17, 1
      %s213 = scalar_select %p212, %s17, 1
      %p214 = scmp.lt.s32.totalorder %s18, 0
      %s215 = scalar_select %p214, %s18, 0
      %s216 = smul.addr %s215, 2
      %s217 = smul.addr %s213, 2
      %s218 = sadd.s32 %s216, %s217
      %s219 = smul.addr %s218, 4
      %s220 = scalar_lea.vmem %s2, %s219
      // Predicated region
      $region29: #{dropblock2d_forward.3} parent=27 // pred_check
        %p221 = pneg %p99
      $region30: #{dropblock2d_forward.3} parent=27 // pred_check_branch
        %223 = sbr.rel (%p221) target = $region32
      $region31: #{dropblock2d_forward.3} parent=27 // pred_region
        _
      $region32: #{dropblock2d_forward.3} parent=27 // pred_fallthru
        _
    $region28: #{dropblock2d_forward.3} parent=5 // pred_fallthru
      _
    %p224 = scmp.le.s32.totalorder 2, %s8
    // Predicated region
    $region33: #{dropblock2d_forward.3} parent=5 // pred_check
      %p225 = pneg %p224
    $region34: #{dropblock2d_forward.3} parent=5 // pred_check_branch
      %227 = sbr.rel (%p225) target = $region36
    $region35: #{dropblock2d_forward.3} parent=5 // pred_region
      %s228 = ssub.s32 %s8, 2
      // Predicated region
      $region37: #{dropblock2d_forward.3} parent=35 // pred_check
        %p229 = pneg %p105
      $region38: #{dropblock2d_forward.3} parent=35 // pred_check_branch
        %231 = sbr.rel (%p229) target = $region40
      $region39: #{dropblock2d_forward.3} parent=35 // pred_region
        %p232 = scmp.lt.s32.totalorder %s19, 1
        %s233 = scalar_select %p232, %s19, 1
        %p234 = scmp.lt.s32.totalorder %s20, 0
        %s235 = scalar_select %p234, %s20, 0
        %s236 = smul.addr %s235, 2
        %s237 = smul.addr %s233, 2
        %s238 = sadd.s32 %s236, %s237
        %s239 = smul.addr %s238, 4
        %s240 = scalar_lea.vmem %s2, %s239
      $region40: #{dropblock2d_forward.3} parent=35 // pred_fallthru
        _
    $region36: #{dropblock2d_forward.3} parent=5 // pred_fallthru
      _
  $region6: #{dropblock2d_forward.3} parent=0 // loop_footer
    %s12 = sadd.s32 1, %s8
  $region7: #{dropblock2d_forward.3} parent=0 // loop_footer_branch
    %7 = sbr.rel target = $region3
  $region8: #{dropblock2d_forward.3} parent=0 // loop_exit
    _

// kernel: dropblock2d_forward.2
$region0: #{dropblock2d_forward.2}
  #allocation0 [shape = 'u32[]', space=smem, size = 0x4, offset = 0x4, fixed_abs, tag = 'smem constant byte address 0x4 - core index']
  #allocation1 [shape = 'u32[144,128]{1,0:T(1,128)}', space=vmem, size = 0x12000, scoped, tag = 'internal scratch']
  %s0 = inlined_call_operand.vmem [shape: f32[2,18,18], index: 0, kind: input, shape index: {}]
  %s1 = inlined_call_operand.vmem [shape: f32[2,16,16], index: 1, kind: output, shape index: {0}]
  %s2 = inlined_call_operand.vmem [shape: f32[2,1,1], index: 2, kind: output, shape index: {1}]
  %3 = xla_tuple %s1, %s2
  %s4 = sld [smem:[#allocation0]]
  $region22: #{dropblock2d_forward.2} parent=0
    _
  %s6 = ssub.s32 1, %s4
  %s7 = scalar_select 0, %s6, %s4
  // Predicated region
  $region2: #{dropblock2d_forward.2} parent=0 // pred_check
    _
  $region3: #{dropblock2d_forward.2} parent=0 // pred_check_branch
    %9 = sbr.rel (0) target = $region5
  $region4: #{dropblock2d_forward.2} parent=0 // pred_region
    _
  $region5: #{dropblock2d_forward.2} parent=0 // pred_fallthru
    _
  %v10 = vld [vmem:[%s0] sm:$0xff]
  %v11 = vld [vmem:[%s0 + $0x8] sm:$0xff]
  %v12 = vld [vmem:[%s0 + $0x10] sm:$0x3]
  %v13 = vld [vmem:[%s0 + $0x18] sm:$0xff]
  %v14 = vld [vmem:[%s0 + $0x20] sm:$0xff]
  %v15 = vld [vmem:[%s0 + $0x28] sm:$0x3]
  %vm16 = vcmp.lt.f32.partialorder %v10, 0.011111111
  %vm17 = vcmp.lt.f32.partialorder %v11, 0.011111111
  %vm18 = vcmp.lt.f32.partialorder %v12, 0.011111111
  %vm19 = vcmp.lt.f32.partialorder %v13, 0.011111111
  %vm20 = vcmp.lt.f32.partialorder %v14, 0.011111111
  %vm21 = vcmp.lt.f32.partialorder %v15, 0.011111111
  %v22 = vsel %vm16, 1, 0
  %v23 = vsel %vm17, 1, 0
  %v24 = vsel %vm18, 1, 0
  %v25 = vsel %vm19, 1, 0
  %v26 = vsel %vm20, 1, 0
  %v27 = vsel %vm21, 1, 0
  %v28 = vcvt.s32.f32 %v22
  %v29 = vcvt.s32.f32 %v23
  %v30 = vcvt.s32.f32 %v24
  %v31 = vcvt.s32.f32 %v25
  %v32 = vcvt.s32.f32 %v26
  %v33 = vcvt.s32.f32 %v27
  %40 = vrot.lane.b32.xlu0 %v28, 127
  %v41 = vpop.permute.xlu0 %40
  %42 = vrot.lane.b32.xlu0 %v29, 127
  %v43 = vpop.permute.xlu0 %42
  %44 = vrot.lane.b32.xlu0 %v30, 127
  %v45 = vpop.permute.xlu0 %44
  %46 = vrot.lane.b32.xlu0 %v31, 127
  %v47 = vpop.permute.xlu0 %46
  %48 = vrot.lane.b32.xlu0 %v32, 127
  %v49 = vpop.permute.xlu0 %48
  %50 = vrot.lane.b32.xlu0 %v33, 127
  %v51 = vpop.permute.xlu0 %50
  %v58 = vmax.f32 %v28, %v41
  %v59 = vmax.f32 %v29, %v43
  %v60 = vmax.f32 %v30, %v45
  %v61 = vmax.f32 %v31, %v47
  %v62 = vmax.f32 %v32, %v49
  %v63 = vmax.f32 %v33, %v51
  %64 = vrot.lane.b32.xlu0 %v28, 126
  %v65 = vpop.permute.xlu0 %64
  %66 = vrot.lane.b32.xlu0 %v29, 126
  %v67 = vpop.permute.xlu0 %66
  %68 = vrot.lane.b32.xlu0 %v30, 126
  %v69 = vpop.permute.xlu0 %68
  %70 = vrot.lane.b32.xlu0 %v31, 126
  %v71 = vpop.permute.xlu0 %70
  %72 = vrot.lane.b32.xlu0 %v32, 126
  %v73 = vpop.permute.xlu0 %72
  %74 = vrot.lane.b32.xlu0 %v33, 126
  %v75 = vpop.permute.xlu0 %74
  %v82 = vmax.f32 %v58, %v65
  %v83 = vmax.f32 %v59, %v67
  %v84 = vmax.f32 %v60, %v69
  %v85 = vmax.f32 %v61, %v71
  %v86 = vmax.f32 %v62, %v73
  %v87 = vmax.f32 %v63, %v75
  %vm94 = vcmask 1046528
  %v95 = vrot.slane %v82, 1
  %v96 = vrot.slane %v83, 1
  %v97 = vsel %vm94, %v95, %v96
  %v98 = vrot.slane %v84, 1
  %v99 = vsel %vm94, %v96, %v98
  %v100 = vrot.slane %v85, 1
  %v101 = vrot.slane %v86, 1
  %v102 = vsel %vm94, %v100, %v101
  %v103 = vrot.slane %v87, 1
  %v104 = vsel %vm94, %v101, %v103
  %v109 = vmax.f32 %v82, %v97
  %v110 = vmax.f32 %v83, %v99
  %v111 = vmax.f32 %v85, %v102
  %v112 = vmax.f32 %v86, %v104
  %vm113 = vcmask 1045504
  %v114 = vrot.slane %v82, 2
  %v115 = vrot.slane %v83, 2
  %v116 = vsel %vm113, %v114, %v115
  %v117 = vrot.slane %v84, 2
  %v118 = vsel %vm113, %v115, %v117
  %v119 = vrot.slane %v85, 2
  %v120 = vrot.slane %v86, 2
  %v121 = vsel %vm113, %v119, %v120
  %v122 = vrot.slane %v87, 2
  %v123 = vsel %vm113, %v120, %v122
  %v128 = vmax.f32 %v109, %v116
  %v129 = vmax.f32 %v110, %v118
  %v130 = vmax.f32 %v111, %v121
  %v131 = vmax.f32 %v112, %v123
  %v132 = vsub.f32 1.0, %v128
  %v133 = vsub.f32 1.0, %v129
  %v134 = vsub.f32 1.0, %v130
  %v135 = vsub.f32 1.0, %v131
  %vm136 = vcmask 130048
  %137 = vst.msk [vmem:[%s1] sm:$0xff] %vm136, %v132
  %138 = vst.msk [vmem:[%s1 + $0x8] sm:$0xff] %vm136, %v133
  %139 = vst.msk [vmem:[%s1 + $0x10] sm:$0xff] %vm136, %v134
  %140 = vst.msk [vmem:[%s1 + $0x18] sm:$0xff] %vm136, %v135
  %v141 = vsel %vm136, %v132, 0.0
  %142 = vadd.xlane.f32.xlu0 %v141
  %v143 = vpop.xlane.xlu0 %142
  %v144 = vsel %vm136, %v133, 0.0
  %145 = vadd.xlane.f32.xlu0 %v144
  %v146 = vpop.xlane.xlu0 %145
  %v147 = vsel %vm136, %v134, 0.0
  %148 = vadd.xlane.f32.xlu0 %v147
  %v149 = vpop.xlane.xlu0 %148
  %v150 = vsel %vm136, %v135, 0.0
  %151 = vadd.xlane.f32.xlu0 %v150
  %v152 = vpop.xlane.xlu0 %151
  %v153 = vadd.f32 %v143, %v146
  %v154 = vrot.slane %v153, 4
  %v155 = vadd.f32 %v153, %v154
  %v156 = vrot.slane %v155, 2
  %v157 = vadd.f32 %v155, %v156
  %v158 = vrot.slane %v157, 1
  %v159 = vadd.f32 %v157, %v158
  %v160 = vadd.f32 %v149, %v152
  %v161 = vrot.slane %v160, 4
  %v162 = vadd.f32 %v160, %v161
  %v163 = vrot.slane %v162, 2
  %v164 = vadd.f32 %v162, %v163
  %v165 = vrot.slane %v164, 1
  %v166 = vadd.f32 %v164, %v165
  %vm167 = vcmask 0
  %168 = vst.msk [vmem:[%s2] sm:$0x1] %vm167, %v159
  %169 = vst.msk [vmem:[%s2 + $0x1] sm:$0x1] %vm167, %v166
  // Predicated region
  $region6: #{dropblock2d_forward.2} parent=0 // pred_check
    _
  $region7: #{dropblock2d_forward.2} parent=0 // pred_check_branch
    %171 = sbr.rel (0) target = $region9
  $region8: #{dropblock2d_forward.2} parent=0 // pred_region
    _
  $region9: #{dropblock2d_forward.2} parent=0 // pred_fallthru
    _
  // Predicated region
  $region10: #{dropblock2d_forward.2} parent=0 // pred_check
    _
  $region11: #{dropblock2d_forward.2} parent=0 // pred_check_branch
    %173 = sbr.rel (0) target = $region13
  $region12: #{dropblock2d_forward.2} parent=0 // pred_region
    _
  $region13: #{dropblock2d_forward.2} parent=0 // pred_fallthru
    _
  // Predicated region
  $region14: #{dropblock2d_forward.2} parent=0 // pred_check
    _
  $region15: #{dropblock2d_forward.2} parent=0 // pred_check_branch
    %175 = sbr.rel (0) target = $region17
  $region16: #{dropblock2d_forward.2} parent=0 // pred_region
    _
  $region17: #{dropblock2d_forward.2} parent=0 // pred_fallthru
    _
  // Predicated region
  $region18: #{dropblock2d_forward.2} parent=0 // pred_check
    _
  $region19: #{dropblock2d_forward.2} parent=0 // pred_check_branch
    %177 = sbr.rel (0) target = $region21
  $region20: #{dropblock2d_forward.2} parent=0 // pred_region
    _
  $region21: #{dropblock2d_forward.2} parent=0 // pred_fallthru
    _

</llo_original>
